<compile_context>
chip_gen: v7x
topology: tpu7x:2x2x1
jax: 0.10.0
libtpu: 0.0.40
codegen_flags: <defaults>
</compile_context>

<pallas_src>
import functools
import numpy as np
import jax
import jax.numpy as jnp
from jax.experimental import pallas as pl
from jax.experimental.pallas import tpu as pltpu


def _sparse_conv_kernel(pc_ref, pp_ref, w_ref, b_ref, o_ref, *, c_out):
    # One MXU matmul computes the conv rows AND the mask-count row.
    #   w_ref: (C_out+1, KKC+KK) bf16, pc_ref: (KKC+KK, TM) bf16
    acc = jnp.dot(w_ref[...], pc_ref[...],
                  preferred_element_type=jnp.float32)          # (C_out+1, TM) f32
    conv = acc[:c_out, :]                                      # (C_out, TM)
    msum = jnp.maximum(acc[c_out:, :], jnp.float32(1e-5))      # torch.clamp(min=1e-5)
    y = conv * pl.reciprocal(msum, approx=True) + b_ref[...]   # EUP reciprocal + bias
    # MaxPool2d on the (-inf padded) mask window: reduce over the KK sublanes.
    mmax = jnp.max(pp_ref[...].astype(jnp.float32), axis=0, keepdims=True)  # (1, TM)
    o_ref[...] = jnp.concatenate([y, mmax], axis=0).astype(o_ref.dtype)


def _extract_patches_t(a_pad, K, stride, dilation, H_out, W_out):
    """a_pad: [N, C, Hp, Wp] -> [K*K, C, N*H_out*W_out] (tap-major, M-minor)."""
    N, C, _, _ = a_pad.shape
    M = N * H_out * W_out
    taps = []
    for kh in range(K):
        for kw in range(K):
            h0, w0 = kh * dilation, kw * dilation
            sl = jax.lax.slice(
                a_pad, (0, 0, h0, w0),
                (N, C, h0 + (H_out - 1) * stride + 1, w0 + (W_out - 1) * stride + 1),
                (1, 1, stride, stride))                        # [N, C, Ho, Wo]
            taps.append(jnp.transpose(sl, (1, 0, 2, 3)).reshape(C, M))
    return jnp.stack(taps, axis=0)                             # [KK, C, M]


def _pick_row_tile(M):
    # Big tiles approach the HBM roofline; keep >=2 grid steps when possible
    # so megacore / v7x's 2 TensorCores both get work.
    for tm in (2048, 1024, 512, 256, 128):
        if M >= 2 * tm:
            return tm
    return 128


def sparse_conv(x, m, weight, bias, *, stride, padding, dilation):
    """x: [N, C_in, H, W], m: [N, 1, H, W] -> (x_out [N,C_out,Ho,Wo], m_out [N,1,Ho,Wo])."""
    N, C_in, H, W = x.shape
    C_out, _, K, K2 = weight.shape
    assert K == K2
    H_out = (H + 2 * padding - dilation * (K - 1) - 1) // stride + 1
    W_out = (W + 2 * padding - dilation * (K - 1) - 1) // stride + 1
    M = N * H_out * W_out
    KK = K * K
    KKC = KK * C_in
    KROW = KKC + KK                       # rows of the fused conv+count stream

    x = x.astype(jnp.float32)
    m = m.astype(jnp.float32)
    xm = x * m                            # x * mc (mask broadcasts over channels)

    pad = ((0, 0), (0, 0), (padding, padding), (padding, padding))
    xm_p = jnp.pad(xm, pad)                                    # zero pad (conv)
    m0_p = jnp.pad(m, pad)                                     # zero pad (count conv)
    minf_p = jnp.pad(m, pad, constant_values=-jnp.inf)         # -inf pad (maxpool)

    px = _extract_patches_t(xm_p, K, stride, dilation, H_out, W_out).reshape(KKC, M)
    pm0 = _extract_patches_t(m0_p, K, stride, dilation, H_out, W_out).reshape(KK, M)
    pminf = _extract_patches_t(minf_p, K, stride, dilation, H_out, W_out).reshape(KK, M)

    # One dense conv+count stream (bf16) and one pool stream (bf16).
    p_conv = jnp.concatenate([px, pm0], axis=0).astype(jnp.bfloat16)   # (KROW, M)
    p_pool = pminf.astype(jnp.bfloat16)                                # (KK,   M)

    TM = _pick_row_tile(M)
    Mp = ((M + TM - 1) // TM) * TM
    if Mp != M:
        # Padded tail columns: conv=0, count=0 -> clamped; pool max over 0s.
        # They are sliced off below, so no NaN/Inf can leak into real outputs.
        p_conv = jnp.pad(p_conv, ((0, 0), (0, Mp - M)))
        p_pool = jnp.pad(p_pool, ((0, 0), (0, Mp - M)))

    # Fused weight matrix: rows 0..C_out-1 = conv weights (tap-major, chan-minor
    # matching the patch row order), row C_out = C_in over the mask-patch
    # columns, which reproduces F.conv2d(mc, ones).
    w_x = jnp.transpose(weight.astype(jnp.float32), (0, 2, 3, 1)).reshape(C_out, KKC)
    w_top = jnp.concatenate([w_x, jnp.zeros((C_out, KK), jnp.float32)], axis=1)
    w_cnt = jnp.concatenate(
        [jnp.zeros((1, KKC), jnp.float32), jnp.full((1, KK), float(C_in), jnp.float32)],
        axis=1)
    w_full = jnp.concatenate([w_top, w_cnt], axis=0).astype(jnp.bfloat16)  # (C_out+1, KROW)
    b_col = bias.reshape(C_out, 1).astype(jnp.float32)

    kernel = functools.partial(_sparse_conv_kernel, c_out=C_out)
    out = pl.pallas_call(
        kernel,
        grid=(Mp // TM,),
        in_specs=[
            pl.BlockSpec((KROW, TM), lambda i: (0, i)),         # fused x*m + mask patches
            pl.BlockSpec((KK, TM), lambda i: (0, i)),           # -inf padded mask patches
            pl.BlockSpec((C_out + 1, KROW), lambda i: (0, 0)),  # fused weights (resident)
            pl.BlockSpec((C_out, 1), lambda i: (0, 0)),         # bias column (resident)
        ],
        out_specs=pl.BlockSpec((C_out + 1, TM), lambda i: (0, i)),
        out_shape=jax.ShapeDtypeStruct((C_out + 1, Mp), jnp.float32),
        compiler_params=pltpu.CompilerParams(dimension_semantics=("parallel",)),
    )(p_conv, p_pool, w_full, b_col)

    out = out[:, :M]                                           # drop row padding
    out_x = out[:C_out].reshape(C_out, N, H_out, W_out).transpose(1, 0, 2, 3)
    out_m = out[C_out:].reshape(1, N, H_out, W_out).transpose(1, 0, 2, 3)
    return out_x, out_m


def reference(x, m, weight, bias, *, stride, padding, dilation):
    """Pure-JAX reference mirroring the PyTorch forward."""
    K = weight.shape[-1]
    mc = jnp.broadcast_to(m, x.shape)
    xm = x * mc
    dn = jax.lax.conv_dimension_numbers(x.shape, weight.shape, ('NCHW', 'OIHW', 'NCHW'))

    def conv(inp, w):
        return jax.lax.conv_general_dilated(
            inp, w, (stride, stride), ((padding, padding), (padding, padding)),
            rhs_dilation=(dilation, dilation), dimension_numbers=dn,
            precision=jax.lax.Precision.HIGHEST)

    y = conv(xm, weight)
    mcc = conv(mc, jnp.ones_like(weight))
    mcc = jnp.maximum(mcc, 1e-5)
    y = y / mcc + bias.reshape(1, -1, 1, 1)

    m_pad = jnp.pad(m, ((0, 0), (0, 0), (padding, padding), (padding, padding)),
                    constant_values=-jnp.inf)
    mp = jax.lax.reduce_window(
        m_pad, -jnp.inf, jax.lax.max,
        window_dimensions=(1, 1, K, K),
        window_strides=(1, 1, stride, stride),
        padding='VALID',
        window_dilation=(1, 1, dilation, dilation))
    return y, mp


if __name__ == "__main__":
    key = jax.random.PRNGKey(0)
    kx, km, kw = jax.random.split(key, 3)

    N, C_in, C_out, H, W, K = 2, 4, 8, 16, 16, 3
    stride, padding, dilation = 1, 1, 1

    x = jax.random.normal(kx, (N, C_in, H, W), dtype=jnp.float32)
    m = (jax.random.uniform(km, (N, 1, H, W)) > 0.5).astype(jnp.float32)

    # Deterministic kaiming_normal_(mode='fan_out', nonlinearity='relu'):
    # std = sqrt(2 / (C_out * K * K)); bias initialized to zeros.
    std = (2.0 / (C_out * K * K)) ** 0.5
    weight = std * jax.random.normal(kw, (C_out, C_in, K, K), dtype=jnp.float32)
    bias = jnp.zeros((C_out,), dtype=jnp.float32)

    out_x, out_m = sparse_conv(x, m, weight, bias,
                               stride=stride, padding=padding, dilation=dilation)
    jax.block_until_ready((out_x, out_m))

    ref_x, ref_m = reference(x, m, weight, bias,
                             stride=stride, padding=padding, dilation=dilation)
    # bf16 patch/weight streams + approx reciprocal -> relaxed fp tolerance.
    np.testing.assert_allclose(np.asarray(out_x), np.asarray(ref_x), rtol=2e-2, atol=2e-3)
    np.testing.assert_allclose(np.asarray(out_m), np.asarray(ref_m), rtol=0, atol=0)

    print("KERNEL_OK")
</pallas_src>

<mosaic_0001>
module attributes {stable_mosaic.version = 11 : i64} {
  func.func @_sparse_conv_kernel(%arg0: i32, %arg1: memref<45x256xbf16, #tpu.memory_space<vmem>>, %arg2: memref<9x256xbf16, #tpu.memory_space<vmem>>, %arg3: memref<9x45xbf16, #tpu.memory_space<vmem>>, %arg4: memref<8x1xf32, #tpu.memory_space<vmem>>, %arg5: memref<9x256xf32, #tpu.memory_space<vmem>>) attributes {dimension_semantics = [#tpu.dimension_semantics<parallel>], iteration_bounds = array<i64: 2>, scalar_prefetch = 0 : i64, scratch_operands = 0 : i64, tpu.core_type = #tpu.core_type<tc>, window_params = [{transform_indices = @transform_0, window_bounds = array<i64: 45, 256>}, {transform_indices = @transform_1, window_bounds = array<i64: 9, 256>}, {pipeline_mode = #tpu.pipeline_mode<synchronous>, transform_indices = @transform_2, window_bounds = array<i64: 9, 45>}, {pipeline_mode = #tpu.pipeline_mode<synchronous>, transform_indices = @transform_3, window_bounds = array<i64: 8, 1>}, {transform_indices = @transform_4, window_bounds = array<i64: 9, 256>}]} {
    %c0 = arith.constant 0 : index
    %c0_0 = arith.constant 0 : index
    %0 = vector.load %arg3[%c0, %c0_0] : memref<9x45xbf16, #tpu.memory_space<vmem>>, vector<9x45xbf16>
    %c0_1 = arith.constant 0 : index
    %c0_2 = arith.constant 0 : index
    %1 = vector.load %arg1[%c0_1, %c0_2] : memref<45x256xbf16, #tpu.memory_space<vmem>>, vector<45x256xbf16>
    %cst = arith.constant dense<0.000000e+00> : vector<9x256xf32>
    %2 = tpu.matmul %0, %1, %cst {dimension_numbers = #tpu.dot_dimension_numbers<[1], [0], [0], [1], [0, 0, 1, 1], [], []>} : vector<9x45xbf16>, vector<45x256xbf16>, vector<9x256xf32> -> vector<9x256xf32>
    %3 = vector.extract_strided_slice %2 {offsets = [0, 0], sizes = [8, 256], strides = [1, 1]} : vector<9x256xf32> to vector<8x256xf32>
    %4 = vector.extract_strided_slice %2 {offsets = [8, 0], sizes = [1, 256], strides = [1, 1]} : vector<9x256xf32> to vector<1x256xf32>
    %cst_3 = arith.constant 9.99999974E-6 : f32
    %5 = vector.broadcast %cst_3 : f32 to vector<1x256xf32>
    %6 = arith.maximumf %4, %5 : vector<1x256xf32>
    %7 = tpu.reciprocal %6 {approx = true} : vector<1x256xf32> -> vector<1x256xf32>
    %8 = vector.broadcast %7 : vector<1x256xf32> to vector<8x256xf32>
    %9 = arith.mulf %3, %8 : vector<8x256xf32>
    %c0_4 = arith.constant 0 : index
    %c0_5 = arith.constant 0 : index
    %10 = vector.load %arg4[%c0_4, %c0_5] : memref<8x1xf32, #tpu.memory_space<vmem>>, vector<8x1xf32>
    %11 = vector.broadcast %10 : vector<8x1xf32> to vector<8x256xf32>
    %12 = arith.addf %9, %11 : vector<8x256xf32>
    %c0_6 = arith.constant 0 : index
    %c0_7 = arith.constant 0 : index
    %13 = vector.load %arg2[%c0_6, %c0_7] : memref<9x256xbf16, #tpu.memory_space<vmem>>, vector<9x256xbf16>
    %14 = arith.extf %13 : vector<9x256xbf16> to vector<9x256xf32>
    %cst_8 = arith.constant dense<0xFF800000> : vector<256xf32>
    %15 = vector.multi_reduction <maximumf>, %14, %cst_8 [0] : vector<9x256xf32> to vector<256xf32>
    %16 = vector.shape_cast %15 : vector<256xf32> to vector<1x256xf32>
    %17 = tpu.concatenate %12, %16 in 0 : vector<8x256xf32>, vector<1x256xf32> -> vector<9x256xf32>
    %c0_9 = arith.constant 0 : index
    %c0_10 = arith.constant 0 : index
    %18 = vector.load %arg5[%c0_9, %c0_10] : memref<9x256xf32, #tpu.memory_space<vmem>>, vector<9x256xf32>
    tpu.vector_store %arg5[%c0_9, %c0_10], %17 {strides = array<i32>} : memref<9x256xf32, #tpu.memory_space<vmem>>, vector<9x256xf32>,
    return
  }
  func.func @transform_0(%arg0: i32) -> (i32, i32) {
    %c0_i32 = arith.constant 0 : i32
    %c0_i32_0 = arith.constant 0 : i32
    return %c0_i32, %arg0 : i32, i32
  }
  func.func @transform_1(%arg0: i32) -> (i32, i32) {
    %c0_i32 = arith.constant 0 : i32
    %c0_i32_0 = arith.constant 0 : i32
    return %c0_i32, %arg0 : i32, i32
  }
  func.func @transform_2(%arg0: i32) -> (i32, i32) {
    %c0_i32 = arith.constant 0 : i32
    %c0_i32_0 = arith.constant 0 : i32
    %c0_i32_1 = arith.constant 0 : i32
    return %c0_i32, %c0_i32_0 : i32, i32
  }
  func.func @transform_3(%arg0: i32) -> (i32, i32) {
    %c0_i32 = arith.constant 0 : i32
    %c0_i32_0 = arith.constant 0 : i32
    %c0_i32_1 = arith.constant 0 : i32
    return %c0_i32, %c0_i32_0 : i32, i32
  }
  func.func @transform_4(%arg0: i32) -> (i32, i32) {
    %c0_i32 = arith.constant 0 : i32
    %c0_i32_0 = arith.constant 0 : i32
    return %c0_i32, %arg0 : i32, i32
  }
}

</mosaic_0001>

<llo_original>
// kernel: tpu_custom_call.1
$region0: #{tpu_custom_call.1}
  #allocation0 [shape = 'u32[]', space=smem, size = 0x4, offset = 0x4, fixed_abs, tag = 'smem constant byte address 0x4 - core index']
  #allocation1 [shape = 'u32[144,128]{1,0:T(1,128)}', space=vmem, size = 0x12000, scoped, tag = 'internal scratch']
  %s0 = inlined_call_operand.hbm [shape: bf16[45,512], index: 0, kind: input, shape index: {}]
  %s1 = inlined_call_operand.hbm [shape: bf16[9,512], index: 1, kind: input, shape index: {}]
  %s2 = inlined_call_operand.vmem [shape: bf16[9,45], index: 2, kind: input, shape index: {}]
  %s3 = inlined_call_operand.vmem [shape: f32[8,1], index: 3, kind: input, shape index: {}]
  %s4 = inlined_call_operand.hbm [shape: f32[9,512], index: 4, kind: output, shape index: {}]
  %s5 = sld [smem:[#allocation0]]
  $region57: #{tpu_custom_call.1} parent=0
    _
  %s7 = ssub.s32 1, %s5
  %s8 = scalar_select 0, %s7, %s5
  $region1: #{tpu_custom_call.1} parent=0
    #allocation2 [shape = 'u8[49152]{0}', space=vmem, size = 0xc000, scoped, tag = 'input window, operand 0']
    #allocation3 [shape = 's32[2]{0}', space=sflag, size = 0x8, scoped, tag = 'scoped memory for tpu_custom_call.1']
    #allocation4 [shape = 's32[2]{0}', space=sflag, size = 0x8, scoped, tag = 'scoped memory for tpu_custom_call.1']
    #allocation5 [shape = 'u8[16384]{0}', space=vmem, size = 0x4000, scoped, tag = 'input window, operand 1']
    #allocation6 [shape = 's32[2]{0}', space=sflag, size = 0x8, scoped, tag = 'scoped memory for tpu_custom_call.1']
    #allocation7 [shape = 'u8[32768]{0}', space=vmem, size = 0x8000, scoped, tag = 'output window, operand 0']
    %9 = vsyncpa [#allocation3], 0
    %s10 = scalar_lea.sflag [#allocation3], 1
    %11 = vsyncpa %s10, 0
    %12 = vsyncpa [#allocation6], 0
    %s13 = scalar_lea.sflag [#allocation6], 1
    %14 = vsyncpa %s13, 0
    %15 = vsyncpa [#allocation4], 0
    %s16 = scalar_lea.sflag [#allocation4], 1
    %17 = vsyncpa %s16, 0
    loop: start=0, step=1, limit=4
    $region2: #{tpu_custom_call.1} parent=1 // loop_pre_header
      _
    $region3: #{tpu_custom_call.1} parent=1 // loop_header
      %s19 = sphi 0, %s23
      %p20 = scmp.ge.s32.totalorder %s19, 4
      %s29 = sphi 0, %s31
      %s32 = sphi 0, %s29
      %s33 = sphi 0, %s32
      %s49 = sphi 0, %s33
      %s55 = sphi 0, %s57
      %s58 = sphi 0, %s55
      %s59 = sphi 0, %s58
      %s75 = sphi 0, %s59
      %s79 = sphi 0, %s79
      %s81 = sphi 0, %s79
      %s82 = sphi 0, %s81
      %s96 = sphi 0, %s82
      %s100 = sphi 0, %s100
      %s102 = sphi 0, %s100
      %s103 = sphi 0, %s102
      %s117 = sphi 0, %s103
      %s123 = sphi 0, %s125
      %s126 = sphi 0, %s123
      %s127 = sphi 0, %s126
      %s143 = sphi 0, %s127
    $region4: #{tpu_custom_call.1} parent=1 // loop_header_branch
      %22 = sbr.rel (%p20) target = $region8
    $region5: #{tpu_custom_call.1} parent=1 // loop_body
      %s24 = ssub.s32 %s19, 1
      %s25 = ssub.s32 %s19, 2
      %s26 = sadd.s32 %s19, 1
      %s27 = ssub.s32 %s19, %s26
      %p28 = scmp.eq.s32.totalorder %s27, 0
      %s30 = sadd.s32 %s29, 1
      %s31 = scalar_select %p28, %s29, %s30
      %p34 = pneg %p28
      %p35 = scmp.eq.s32.totalorder %s19, 1
      %p36 = por %p34, %p35
      %p37 = scmp.ne.s32.totalorder %s29, %s32
      %p38 = scmp.eq.s32.totalorder %s19, 0
      %p39 = por %p37, %p38
      %p40 = scmp.ne.s32.totalorder %s29, %s32
      %p41 = scmp.eq.s32.totalorder %s24, 1
      %p42 = por %p40, %p41
      %p43 = scmp.ne.s32.totalorder %s32, %s33
      %p44 = scmp.eq.s32.totalorder %s24, 0
      %p45 = por %p43, %p44
      %p46 = scmp.ne.s32.totalorder %s32, %s33
      %p47 = scmp.eq.s32.totalorder %s25, 1
      %p48 = por %p46, %p47
      %p50 = scmp.ne.s32.totalorder %s33, %s49
      %p51 = scmp.eq.s32.totalorder %s25, 0
      %p52 = por %p50, %p51
      %s53 = ssub.s32 %s19, %s26
      %p54 = scmp.eq.s32.totalorder %s53, 0
      %s56 = sadd.s32 %s55, 1
      %s57 = scalar_select %p54, %s55, %s56
      %p60 = pneg %p54
      %p61 = scmp.eq.s32.totalorder %s19, 1
      %p62 = por %p60, %p61
      %p63 = scmp.ne.s32.totalorder %s55, %s58
      %p64 = scmp.eq.s32.totalorder %s19, 0
      %p65 = por %p63, %p64
      %p66 = scmp.ne.s32.totalorder %s55, %s58
      %p67 = scmp.eq.s32.totalorder %s24, 1
      %p68 = por %p66, %p67
      %p69 = scmp.ne.s32.totalorder %s58, %s59
      %p70 = scmp.eq.s32.totalorder %s24, 0
      %p71 = por %p69, %p70
      %p72 = scmp.ne.s32.totalorder %s58, %s59
      %p73 = scmp.eq.s32.totalorder %s25, 1
      %p74 = por %p72, %p73
      %p76 = scmp.ne.s32.totalorder %s59, %s75
      %p77 = scmp.eq.s32.totalorder %s25, 0
      %p78 = por %p76, %p77
      %s80 = sadd.s32 %s79, 1
      %p83 = scmp.eq.s32.totalorder %s19, 1
      %p84 = scmp.ne.s32.totalorder %s79, %s81
      %p85 = scmp.eq.s32.totalorder %s19, 0
      %p86 = por %p84, %p85
      %p87 = scmp.ne.s32.totalorder %s79, %s81
      %p88 = scmp.eq.s32.totalorder %s24, 1
      %p89 = por %p87, %p88
      %p90 = scmp.ne.s32.totalorder %s81, %s82
      %p91 = scmp.eq.s32.totalorder %s24, 0
      %p92 = por %p90, %p91
      %p93 = scmp.ne.s32.totalorder %s81, %s82
      %p94 = scmp.eq.s32.totalorder %s25, 1
      %p95 = por %p93, %p94
      %p97 = scmp.ne.s32.totalorder %s82, %s96
      %p98 = scmp.eq.s32.totalorder %s25, 0
      %p99 = por %p97, %p98
      %s101 = sadd.s32 %s100, 1
      %p104 = scmp.eq.s32.totalorder %s19, 1
      %p105 = scmp.ne.s32.totalorder %s100, %s102
      %p106 = scmp.eq.s32.totalorder %s19, 0
      %p107 = por %p105, %p106
      %p108 = scmp.ne.s32.totalorder %s100, %s102
      %p109 = scmp.eq.s32.totalorder %s24, 1
      %p110 = por %p108, %p109
      %p111 = scmp.ne.s32.totalorder %s102, %s103
      %p112 = scmp.eq.s32.totalorder %s24, 0
      %p113 = por %p111, %p112
      %p114 = scmp.ne.s32.totalorder %s102, %s103
      %p115 = scmp.eq.s32.totalorder %s25, 1
      %p116 = por %p114, %p115
      %p118 = scmp.ne.s32.totalorder %s103, %s117
      %p119 = scmp.eq.s32.totalorder %s25, 0
      %p120 = por %p118, %p119
      %s121 = ssub.s32 %s19, %s26
      %p122 = scmp.eq.s32.totalorder %s121, 0
      %s124 = sadd.s32 %s123, 1
      %s125 = scalar_select %p122, %s123, %s124
      %p128 = pneg %p122
      %p129 = scmp.eq.s32.totalorder %s19, 1
      %p130 = por %p128, %p129
      %p131 = scmp.ne.s32.totalorder %s123, %s126
      %p132 = scmp.eq.s32.totalorder %s19, 0
      %p133 = por %p131, %p132
      %p134 = scmp.ne.s32.totalorder %s123, %s126
      %p135 = scmp.eq.s32.totalorder %s24, 1
      %p136 = por %p134, %p135
      %p137 = scmp.ne.s32.totalorder %s126, %s127
      %p138 = scmp.eq.s32.totalorder %s24, 0
      %p139 = por %p137, %p138
      %p140 = scmp.ne.s32.totalorder %s126, %s127
      %p141 = scmp.eq.s32.totalorder %s25, 1
      %p142 = por %p140, %p141
      %p144 = scmp.ne.s32.totalorder %s127, %s143
      %p145 = scmp.eq.s32.totalorder %s25, 0
      %p146 = por %p144, %p145
      %p147 = scmp.le.s32.totalorder 1, %s19
      %p148 = scmp.lt.s32.totalorder %s19, 3
      %p149 = pnand %p147, %p148
      %p150 = pneg %p149
      // Predicated region
      $region9: #{tpu_custom_call.1} parent=5 // pred_check
        _
      $region10: #{tpu_custom_call.1} parent=5 // pred_check_branch
        %152 = sbr.rel (%p149) target = $region12
      $region11: #{tpu_custom_call.1} parent=5 // pred_region
        %s153 = ssub.s32 %s19, 1
        // Predicated region
        $region13: #{tpu_custom_call.1} parent=11 // pred_check
          %p154 = pneg %p92
        $region14: #{tpu_custom_call.1} parent=11 // pred_check_branch
          %156 = sbr.rel (%p154) target = $region16
        $region15: #{tpu_custom_call.1} parent=11 // pred_region
          _
        $region16: #{tpu_custom_call.1} parent=11 // pred_fallthru
          _
        // Predicated region
        $region17: #{tpu_custom_call.1} parent=11 // pred_check
          %p157 = pneg %p113
        $region18: #{tpu_custom_call.1} parent=11 // pred_check_branch
          %159 = sbr.rel (%p157) target = $region20
        $region19: #{tpu_custom_call.1} parent=11 // pred_region
          _
        $region20: #{tpu_custom_call.1} parent=11 // pred_fallthru
          _
      $region12: #{tpu_custom_call.1} parent=5 // pred_fallthru
        _
      %p160 = scmp.lt.s32.totalorder %s19, 2
      // Predicated region
      $region21: #{tpu_custom_call.1} parent=5 // pred_check
        %p161 = pneg %p160
      $region22: #{tpu_custom_call.1} parent=5 // pred_check_branch
        %163 = sbr.rel (%p161) target = $region24
      $region23: #{tpu_custom_call.1} parent=5 // pred_region
        // Predicated region
        $region25: #{tpu_custom_call.1} parent=23 // pred_check
          %p164 = pneg %p39
        $region26: #{tpu_custom_call.1} parent=23 // pred_check_branch
          %166 = sbr.rel (%p164) target = $region28
        $region27: #{tpu_custom_call.1} parent=23 // pred_region
          %s167 = sand.u32 %s29, 1
          %s168 = scalar_lea.sflag [#allocation3], %s167
          %s169 = sand.u32 %s29, 1
          %s170 = smul.addr %s169, 48
          %s171 = scalar_lea.vmem [#allocation2], %s170
          %s172 = smul.u32 2, %s19
          %s174 = ssub.s32 768, 768
          %175 = vsyncadd %s168, %s174
          %s176 = smul.addr %s172, 64
          %s177 = scalar_lea.hbm %s0, %s176
          %s178 = sshll.u32 %s171, 4
          %s179 = int_to_ptr.vmem [resolvable:$true] %s178
          %184 = dma.hbm_to_vmem [thread:$0]  %s177, 768, %s179, %s168, 256, 128, 8
        $region28: #{tpu_custom_call.1} parent=23 // pred_fallthru
          _
        // Predicated region
        $region29: #{tpu_custom_call.1} parent=23 // pred_check
          %p185 = pneg %p65
        $region30: #{tpu_custom_call.1} parent=23 // pred_check_branch
          %187 = sbr.rel (%p185) target = $region32
        $region31: #{tpu_custom_call.1} parent=23 // pred_region
          %s188 = sand.u32 %s55, 1
          %s189 = scalar_lea.sflag [#allocation6], %s188
          %s190 = sand.u32 %s55, 1
          %s191 = smul.addr %s190, 16
          %s192 = scalar_lea.vmem [#allocation5], %s191
          %s193 = smul.u32 2, %s19
          %s195 = ssub.s32 256, 256
          %196 = vsyncadd %s189, %s195
          %s197 = smul.addr %s193, 64
          %s198 = scalar_lea.hbm %s1, %s197
          %s199 = sshll.u32 %s192, 4
          %s200 = int_to_ptr.vmem [resolvable:$true] %s199
          %205 = dma.hbm_to_vmem [thread:$0]  %s198, 256, %s200, %s189, 256, 128, 8
        $region32: #{tpu_custom_call.1} parent=23 // pred_fallthru
          _
      $region24: #{tpu_custom_call.1} parent=5 // pred_fallthru
        _
      %p206 = scmp.le.s32.totalorder 1, %s19
      %p207 = scmp.lt.s32.totalorder %s19, 3
      %p208 = pnand %p206, %p207
      %p209 = pneg %p208
      // Predicated region
      $region33: #{tpu_custom_call.1} parent=5 // pred_check
        _
      $region34: #{tpu_custom_call.1} parent=5 // pred_check_branch
        %211 = sbr.rel (%p208) target = $region36
      $region35: #{tpu_custom_call.1} parent=5 // pred_region
        %s212 = ssub.s32 %s19, 1
        %s213 = sand.u32 %s32, 1
        %s214 = scalar_lea.sflag [#allocation3], %s213
        %s215 = sand.u32 %s32, 1
        %s216 = smul.addr %s215, 48
        %s217 = scalar_lea.vmem [#allocation2], %s216
        // Predicated region
        $region37: #{tpu_custom_call.1} parent=35 // pred_check
          %p218 = pneg %p45
        $region38: #{tpu_custom_call.1} parent=35 // pred_check_branch
          %220 = sbr.rel (%p218) target = $region40
        $region39: #{tpu_custom_call.1} parent=35 // pred_region
          %221 = dma.done %s214, 768
        $region40: #{tpu_custom_call.1} parent=35 // pred_fallthru
          _
        %s222 = sand.u32 %s58, 1
        %s223 = scalar_lea.sflag [#allocation6], %s222
        %s224 = sand.u32 %s58, 1
        %s225 = smul.addr %s224, 16
        %s226 = scalar_lea.vmem [#allocation5], %s225
        // Predicated region
        $region41: #{tpu_custom_call.1} parent=35 // pred_check
          %p227 = pneg %p71
        $region42: #{tpu_custom_call.1} parent=35 // pred_check_branch
          %229 = sbr.rel (%p227) target = $region44
        $region43: #{tpu_custom_call.1} parent=35 // pred_region
          %230 = dma.done %s223, 256
        $region44: #{tpu_custom_call.1} parent=35 // pred_fallthru
          _
        %s231 = sand.u32 %s32, 1
        %s232 = scalar_lea.sflag [#allocation3], %s231
        %s233 = sand.u32 %s32, 1
        %s234 = smul.addr %s233, 48
        %s235 = scalar_lea.vmem [#allocation2], %s234
        %p236 = pneg %p45
        %p237 = pneg %p42
        %s238 = sand.u32 %s58, 1
        %s239 = scalar_lea.sflag [#allocation6], %s238
        %s240 = sand.u32 %s58, 1
        %s241 = smul.addr %s240, 16
        %s242 = scalar_lea.vmem [#allocation5], %s241
        %p243 = pneg %p71
        %p244 = pneg %p68
        %p245 = pneg %p92
        %p246 = pneg %p89
        %p247 = pneg %p113
        %p248 = pneg %p110
        %p249 = pneg %p139
        %p250 = pneg %p136
        %s251 = sand.u32 %s126, 1
        %s252 = scalar_lea.sflag [#allocation4], %s251
        %s253 = sand.u32 %s126, 1
        %s254 = smul.addr %s253, 32
        %s255 = scalar_lea.vmem [#allocation7], %s254
        %s256 = smul.u32 2, %s24
        %s257 = smul.u32 2, %s24
        %s258 = smul.u32 2, %s24
        %v260 = vld [vmem:[%s2] sm:$0xf]
        %v261 = vld [vmem:[%s2 + $0x4] sm:$0x1]
        %v262 = vld [vmem:[%s217] sm:$0xff]
        %v263 = vld [vmem:[%s217 + $0x8] sm:$0xff]
        %v264 = vld [vmem:[%s217 + $0x10] sm:$0xff]
        %v265 = vld [vmem:[%s217 + $0x18] sm:$0xff]
        %v266 = vld [vmem:[%s217 + $0x20] sm:$0xff]
        %v267 = vld [vmem:[%s217 + $0x28] sm:$0x77]
        %v270 = vunpack.c.l.b16 %v260
        %v271 = vunpack.c.l.b16 %v261
        %v272 = vpack.c.b16 %v271, %v270
        %v279 = vunpack.c.l.b16 %v262
        %v280 = vunpack.c.h.b16 %v262
        %v281 = vunpack.c.l.b16 %v263
        %v282 = vunpack.c.h.b16 %v263
        %v283 = vunpack.c.l.b16 %v264
        %v284 = vunpack.c.h.b16 %v264
        %v285 = vunpack.c.l.b16 %v265
        %v286 = vunpack.c.h.b16 %v265
        %v287 = vunpack.c.l.b16 %v266
        %v288 = vunpack.c.h.b16 %v266
        %v289 = vunpack.c.l.b16 %v267
        %v290 = vunpack.c.h.b16 %v267
        %v291 = vpack.c.b16 %v281, %v279
        %v292 = vpack.c.b16 %v282, %v280
        %v293 = vpack.c.b16 %v285, %v283
        %v294 = vpack.c.b16 %v286, %v284
        %v295 = vpack.c.b16 %v289, %v287
        %v296 = vpack.c.b16 %v290, %v288
        %vm301 = vcmask 367616
        %v303 = vsel %vm301, %v272, 0
        %vm305 = vcmask 1045504
        %vm306 = vcmask 1046528
        %v307 = vsel %vm305, 4294967295, 65535
        %v308 = vsel %vm306, %v307, 0
        %v310 = vand.u32 %v295, %v308
        %v313 = vand.u32 %v296, %v308
        %315 = vmatprep.subr.bf16.mxu0 %v292
        %316 = vmatpush1.bf16.msra.mxu0 %v291
        %317 = vmatprep.subr.bf16.mxu0 %v294
        %318 = vmatpush1.bf16.msra.mxu0 %v293
        %319 = vmatprep.subr.bf16.mxu0 %v313
        %320 = vmatpush1.bf16.msra.mxu0 %v310
        %321 = vmatprep.subr.bf16.mxu0 0
        %322 = vmatpush1.bf16.msra.mxu0 0
        %323 = vmatprep.subr.bf16.mxu0 0
        %324 = vmatpush1.bf16.msra.mxu0 0
        %325 = vmatprep.subr.bf16.mxu0 0
        %326 = vmatpush1.bf16.msra.mxu0 0
        %327 = vmatprep.subr.bf16.mxu0 0
        %328 = vmatpush1.bf16.msra.mxu0 0
        %329 = vmatprep.subr.bf16.mxu0 0
        %330 = vmatpush1.bf16.msra.mxu0 0
        %331 = vmatprep.subr.bf16.mxu0 0
        %332 = vmatpush1.bf16.msra.mxu0 0
        %333 = vmatprep.subr.bf16.mxu0 0
        %334 = vmatpush1.bf16.msra.mxu0 0
        %335 = vmatprep.subr.bf16.mxu0 0
        %336 = vmatpush1.bf16.msra.mxu0 0
        %337 = vmatprep.subr.bf16.mxu0 0
        %338 = vmatpush1.bf16.msra.mxu0 0
        %339 = vmatprep.subr.bf16.mxu0 0
        %340 = vmatpush1.bf16.msra.mxu0 0
        %341 = vmatprep.subr.bf16.mxu0 0
        %342 = vmatpush1.bf16.msra.mxu0 0
        %343 = vmatprep.subr.bf16.mxu0 0
        %344 = vmatpush1.bf16.msra.mxu0 0
        %345 = vmatprep.subr.bf16.mxu0 0
        %346 = vmatpush1.bf16.msra.mxu0 0
        %347 = vmatprep.mubr.bf16.mxu0 0
        %348 = vmatmul.mubr.bf16.gmra.mrb[0].mxu0 %v303
        %v349 = vpop.f32.mrb[0].mxu0
        %v350 = vadd.f32 0.0, %v349
        %v351 = vpop.f32.mrb[0].mxu0
        %v352 = vadd.f32 0.0, %v351
        %v353 = vpop.f32.mrb[0].mxu0
        %v354 = vadd.f32 0.0, %v353
        %v355 = vpop.f32.mrb[0].mxu0
        %v356 = vadd.f32 0.0, %v355
        %357 = vdwg.mxu0
        %v358 = vmax.f32 %v354, 1e-05
        %v359 = vmax.f32 %v356, 1e-05
        %v360 = vrcp.pop %v358
        %v361 = vrcp.pop %v359
        %v362 = vlaneseq
        %v363 = vshrl.u32 %v362, 7
        %v364 = vsub.s32 0, %v363
        %v365 = vrot.slane %v360, %v364
        %v366 = vlaneseq
        %v367 = vshrl.u32 %v366, 7
        %v368 = vsub.s32 0, %v367
        %v369 = vrot.slane %v361, %v368
        %v370 = vmul.f32 %v350, %v365
        %v371 = vmul.f32 %v352, %v369
        %v372 = vld [vmem:[%s3] sm:$0xff]
        %374 = vset.pattern.permute.xlu0 0
        %375 = vperm.xlu0 %374, %v372
        %v376 = vpop.permute.xlu0 %375
        %v378 = vadd.f32 %v370, %v376
        %v379 = vadd.f32 %v371, %v376
        %v380 = vld [vmem:[%s226] sm:$0xff]
        %v381 = vld [vmem:[%s226 + $0x8] sm:$0x11]
        %v382 = vunpack.c.l.bf16 %v380
        %v383 = vunpack.c.h.bf16 %v380
        %v384 = vunpack.c.l.bf16 %v381
        %v385 = vunpack.c.h.bf16 %v381
        %vm386 = vcmask 1040384
        %v387 = vsel %vm386, %v384, -inf
        %v388 = vmax.f32 %v382, %v387
        %v389 = vrot.slane %v388, 4
        %v390 = vmax.f32 %v388, %v389
        %v391 = vrot.slane %v390, 2
        %v392 = vmax.f32 %v390, %v391
        %v393 = vrot.slane %v392, 1
        %v394 = vmax.f32 %v392, %v393
        %v395 = vsel %vm386, %v385, -inf
        %v396 = vmax.f32 %v383, %v395
        %v397 = vrot.slane %v396, 4
        %v398 = vmax.f32 %v396, %v397
        %v399 = vrot.slane %v398, 2
        %v400 = vmax.f32 %v398, %v399
        %v401 = vrot.slane %v400, 1
        %v402 = vmax.f32 %v400, %v401
        %403 = vst [vmem:[%s255] sm:$0xff] %v378
        %404 = vst [vmem:[%s255 + $0x8] sm:$0xff] %v379
        %405 = vst [vmem:[%s255 + $0x10] sm:$0x1] %v394
        %406 = vst [vmem:[%s255 + $0x18] sm:$0x1] %v402
        %s407 = sand.u32 %s126, 1
        %s408 = scalar_lea.sflag [#allocation4], %s407
        %s409 = sand.u32 %s126, 1
        %s410 = smul.addr %s409, 32
        %s411 = scalar_lea.vmem [#allocation7], %s410
        // Predicated region
        $region45: #{tpu_custom_call.1} parent=35 // pred_check
          %p412 = pneg %p136
        $region46: #{tpu_custom_call.1} parent=35 // pred_check_branch
          %414 = sbr.rel (%p412) target = $region48
        $region47: #{tpu_custom_call.1} parent=35 // pred_region
          %s415 = smul.u32 2, %s24
          %s417 = ssub.s32 512, 512
          %418 = vsyncadd %s408, %s417
          %s419 = smul.addr %s415, 128
          %s420 = scalar_lea.hbm %s4, %s419
          %s421 = sshll.u32 %s411, 4
          %s422 = int_to_ptr.vmem [resolvable:$true] %s421
          %427 = dma.vmem_to_hbm [thread:$0]  %s422, 512, %s420, %s408, 256, 512, 16
        $region48: #{tpu_custom_call.1} parent=35 // pred_fallthru
          _
      $region36: #{tpu_custom_call.1} parent=5 // pred_fallthru
        _
      %p428 = scmp.le.s32.totalorder 2, %s19
      // Predicated region
      $region49: #{tpu_custom_call.1} parent=5 // pred_check
        %p429 = pneg %p428
      $region50: #{tpu_custom_call.1} parent=5 // pred_check_branch
        %431 = sbr.rel (%p429) target = $region52
      $region51: #{tpu_custom_call.1} parent=5 // pred_region
        %s432 = ssub.s32 %s19, 2
        // Predicated region
        $region53: #{tpu_custom_call.1} parent=51 // pred_check
          %p433 = pneg %p142
        $region54: #{tpu_custom_call.1} parent=51 // pred_check_branch
          %435 = sbr.rel (%p433) target = $region56
        $region55: #{tpu_custom_call.1} parent=51 // pred_region
          %s436 = sand.u32 %s127, 1
          %s437 = scalar_lea.sflag [#allocation4], %s436
          %s438 = sand.u32 %s127, 1
          %s439 = smul.addr %s438, 32
          %s440 = scalar_lea.vmem [#allocation7], %s439
          %441 = dma.done %s437, 512
        $region56: #{tpu_custom_call.1} parent=51 // pred_fallthru
          _
      $region52: #{tpu_custom_call.1} parent=5 // pred_fallthru
        _
    $region6: #{tpu_custom_call.1} parent=1 // loop_footer
      %s23 = sadd.s32 1, %s19
    $region7: #{tpu_custom_call.1} parent=1 // loop_footer_branch
      %18 = sbr.rel target = $region3
    $region8: #{tpu_custom_call.1} parent=1 // loop_exit
      _
    %442 = vsyncpa [#allocation3], 1
    %s443 = scalar_lea.sflag [#allocation3], 1
    %444 = vsyncpa %s443, 1
    %445 = vsyncpa [#allocation6], 1
    %s446 = scalar_lea.sflag [#allocation6], 1
    %447 = vsyncpa %s446, 1
    %448 = vsyncpa [#allocation4], 1
    %s449 = scalar_lea.sflag [#allocation4], 1
    %450 = vsyncpa %s449, 1

</llo_original>
